<compile_context>
chip_gen: v7x
topology: tpu7x:2x2x1
jax: 0.10.0
libtpu: 0.0.40
codegen_flags: <defaults>
</compile_context>

<pallas_src>
import functools

import jax
import jax.numpy as jnp
from jax import lax
from jax.experimental import pallas as pl
from jax.experimental.pallas import tpu as pltpu

# ---- feature dims from the PyTorch module -----------------------------------
HYBRID_LIST_LEN = 5
ATOM_FDIM = 100 + HYBRID_LIST_LEN + 6 + 5 + 4 + 7 + 5 + 3 + 1   # = 136
BOND_FDIM = 6 + 6                                               # = 12
BOND_IN = ATOM_FDIM + BOND_FDIM                                 # = 148

LANE = 128
SUBLANE = 8


def _round_up(x, m):
    return (x + m - 1) // m * m


# ------------------------------ the kernel -----------------------------------
def mpn_kernel(fbonds_ref, fatoms_ref, badj_ref, aadj_ref, scope_ref,
               inv_len_ref, wi_ref, wh_ref, wo_a_ref, wo_n_ref, bo_ref,
               out_ref, *, depth):
    """Whole MPN forward for one molecular batch, all tiles resident in VMEM."""
    f32, bf16 = jnp.float32, jnp.bfloat16

    # binput = W_i(fbonds); message = relu(binput)      (bf16 MXU, f32 acc)
    binput = jnp.dot(fbonds_ref[...], wi_ref[...], preferred_element_type=f32)
    message = jnp.maximum(binput, 0.0)

    # depth-1 message passing steps:
    #   nei[b] = sum_j message[bgraph[b, j]]   ==  badj @ message
    #   message = relu(binput + W_h(nei))
    # fori_loop keeps a single `message` carry live; binput stays resident.
    def step(_, msg):
        nei = jnp.dot(badj_ref[...], msg.astype(bf16),
                      preferred_element_type=f32)
        nei = jnp.dot(nei.astype(bf16), wh_ref[...],
                      preferred_element_type=f32)
        return jnp.maximum(binput + nei, 0.0)

    message = lax.fori_loop(0, depth - 1, step, message, unroll=True)

    # atom readout: gather-sum bonds into atoms, then
    # relu(W_o(cat([fatoms, nei_a]))) with W_o split into atom / nei halves.
    nei_a = jnp.dot(aadj_ref[...], message.astype(bf16),
                    preferred_element_type=f32)
    ainput = (jnp.dot(fatoms_ref[...], wo_a_ref[...],
                      preferred_element_type=f32)
              + jnp.dot(nei_a.astype(bf16), wo_n_ref[...],
                        preferred_element_type=f32)
              + bo_ref[...])
    atom_hiddens = jnp.maximum(ainput, 0.0)

    # per-molecule mean pooling: 0/1 scope mask matmul (f32 acc), then
    # multiply by 1/len in f32 (no bf16 rounding of the division).
    pooled = jnp.dot(scope_ref[...], atom_hiddens.astype(bf16),
                     preferred_element_type=f32)
    out_ref[...] = pooled * inv_len_ref[...]


# --------------------------- host-side preparation ---------------------------
def _prepare(fatoms, fbonds, agraph, bgraph, scope, params):
    """Pad to (8,128)-aligned shapes, build bf16 adjacency/scope operands."""
    n_atoms, atom_fdim = fatoms.shape
    n_bonds, bond_in = fbonds.shape
    max_nb = bgraph.shape[1]
    hidden = params["W_i"].shape[1]
    n_mols = len(scope)

    nb_p = _round_up(n_bonds, SUBLANE)
    na_p = _round_up(n_atoms, SUBLANE)
    nm_p = _round_up(n_mols, SUBLANE)
    hid_p = _round_up(hidden, LANE)
    bfd_p = _round_up(bond_in, LANE)    # 148 -> 256
    afd_p = _round_up(atom_fdim, LANE)  # 136 -> 256

    bf16 = jnp.bfloat16

    def pad2(x, r, c, dtype):
        out = jnp.zeros((r, c), dtype)
        return out.at[:x.shape[0], :x.shape[1]].set(x.astype(dtype))

    fbonds_p = pad2(fbonds, nb_p, bfd_p, bf16)
    fatoms_p = pad2(fatoms, na_p, afd_p, bf16)

    # Sparse -> dense adjacency via scatter-add (O(n * max_nb) work).
    # Values are small integer counts -> exact in bf16.
    rb = jnp.repeat(jnp.arange(n_bonds), max_nb)
    badj = (jnp.zeros((nb_p, nb_p), jnp.float32)
            .at[rb, bgraph.reshape(-1)].add(1.0)).astype(bf16)
    ra = jnp.repeat(jnp.arange(n_atoms), agraph.shape[1])
    aadj = (jnp.zeros((na_p, nb_p), jnp.float32)
            .at[ra, agraph.reshape(-1)].add(1.0)).astype(bf16)

    # Scope -> 0/1 pooling mask (vectorized, no per-molecule Python row loop)
    # plus a separate f32 1/len column applied inside the kernel.
    starts = jnp.asarray([s for s, _ in scope], jnp.int32)
    lens = jnp.asarray([l for _, l in scope], jnp.int32)
    atom_ids = jnp.arange(na_p, dtype=jnp.int32)
    mask = ((atom_ids[None, :] >= starts[:, None]) &
            (atom_ids[None, :] < (starts + lens)[:, None])).astype(jnp.float32)
    scope_mask = (jnp.zeros((nm_p, na_p), jnp.float32)
                  .at[:n_mols].set(mask)).astype(bf16)
    inv_len = (jnp.zeros((nm_p, 1), jnp.float32)
               .at[:n_mols, 0].set(1.0 / lens.astype(jnp.float32)))

    # Weights, pre-transposed as [in, out]; W_o split into atom / nei halves.
    wi = pad2(params["W_i"], bfd_p, hid_p, bf16)
    wh = pad2(params["W_h"], hid_p, hid_p, bf16)
    wo = params["W_o"]
    wo_a = pad2(wo[:atom_fdim, :], afd_p, hid_p, bf16)
    wo_n = pad2(wo[atom_fdim:, :], hid_p, hid_p, bf16)
    bo = pad2(params["b_o"].reshape(1, hidden), 1, hid_p, jnp.float32)

    operands = (fbonds_p, fatoms_p, badj, aadj, scope_mask, inv_len,
                wi, wh, wo_a, wo_n, bo)
    dims = dict(n_mols=n_mols, hidden=hidden, nm_p=nm_p, hid_p=hid_p,
                nb_p=nb_p, na_p=na_p, bfd_p=bfd_p, afd_p=afd_p)
    return operands, dims


def mpn_forward(fatoms, fbonds, agraph, bgraph, scope, params, depth):
    """Build padded bf16 operands and run the single Pallas kernel."""
    operands, d = _prepare(fatoms, fbonds, agraph, bgraph, scope, params)
    nb_p, na_p, nm_p = d["nb_p"], d["na_p"], d["nm_p"]
    hid_p, bfd_p, afd_p = d["hid_p"], d["bfd_p"], d["afd_p"]

    flops = 2 * (
        nb_p * bfd_p * hid_p                                       # W_i
        + (depth - 1) * (nb_p * nb_p * hid_p + nb_p * hid_p * hid_p)
        + na_p * nb_p * hid_p                                      # atom gather
        + na_p * afd_p * hid_p + na_p * hid_p * hid_p              # W_o halves
        + nm_p * na_p * hid_p)                                     # pooling
    bytes_accessed = int(sum(x.size * x.dtype.itemsize for x in operands)
                         + nm_p * hid_p * 4)

    vmem = pl.BlockSpec(memory_space=pltpu.MemorySpace.VMEM)
    out_pad = pl.pallas_call(
        functools.partial(mpn_kernel, depth=depth),
        out_shape=jax.ShapeDtypeStruct((nm_p, hid_p), jnp.float32),
        in_specs=[vmem] * len(operands),
        out_specs=vmem,
        compiler_params=pltpu.CompilerParams(
            vmem_limit_bytes=48 * 1024 * 1024),
        cost_estimate=pl.CostEstimate(flops=int(flops), transcendentals=0,
                                      bytes_accessed=bytes_accessed),
    )(*operands)
    return out_pad[:d["n_mols"], :d["hidden"]]


# ------------------------------- references ----------------------------------
def mpn_reference(fatoms, fbonds, agraph, bgraph, scope, params, depth):
    """Pure-JAX f32 reference mirroring the PyTorch forward (eval mode)."""
    wi, wh, wo, bo = params["W_i"], params["W_h"], params["W_o"], params["b_o"]
    binput = fbonds @ wi
    message = jnp.maximum(binput, 0.0)
    for _ in range(depth - 1):
        nei = message[bgraph].sum(axis=1)          # index_select_ND + sum
        nei = nei @ wh
        message = jnp.maximum(binput + nei, 0.0)
    nei_a = message[agraph].sum(axis=1)
    ainput = jnp.concatenate([fatoms, nei_a], axis=1)
    atom_hiddens = jnp.maximum(ainput @ wo + bo, 0.0)
    mol_vecs = [atom_hiddens[st:st + le].sum(axis=0) / le for st, le in scope]
    return jnp.stack(mol_vecs, axis=0)


def mpn_matched_reference(fatoms, fbonds, agraph, bgraph, scope, params, depth):
    """Plain-XLA version of the exact bf16/padded formulation used in-kernel."""
    (fbonds_p, fatoms_p, badj, aadj, scope_mask, inv_len,
     wi, wh, wo_a, wo_n, bo), d = _prepare(fatoms, fbonds, agraph, bgraph,
                                           scope, params)
    f32, bf16 = jnp.float32, jnp.bfloat16
    binput = jnp.dot(fbonds_p, wi, preferred_element_type=f32)
    message = jnp.maximum(binput, 0.0)
    for _ in range(depth - 1):
        nei = jnp.dot(badj, message.astype(bf16), preferred_element_type=f32)
        nei = jnp.dot(nei.astype(bf16), wh, preferred_element_type=f32)
        message = jnp.maximum(binput + nei, 0.0)
    nei_a = jnp.dot(aadj, message.astype(bf16), preferred_element_type=f32)
    ainput = (jnp.dot(fatoms_p, wo_a, preferred_element_type=f32)
              + jnp.dot(nei_a.astype(bf16), wo_n, preferred_element_type=f32)
              + bo)
    atom_hiddens = jnp.maximum(ainput, 0.0)
    pooled = jnp.dot(scope_mask, atom_hiddens.astype(bf16),
                     preferred_element_type=f32)
    out = pooled * inv_len
    return out[:d["n_mols"], :d["hidden"]]


# ---------------------------------- main --------------------------------------
if __name__ == "__main__":
    hidden_size = 32
    depth = 3
    n_atoms = 16
    n_bonds = 24
    max_nb = 6
    scope = [(0, 9), (9, 7)]   # two molecules: atoms [0,9) and [9,16)

    key = jax.random.PRNGKey(0)
    k1, k2, k3, k4, k5, k6, k7, k8 = jax.random.split(key, 8)

    fatoms = jax.random.normal(k1, (n_atoms, ATOM_FDIM), dtype=jnp.float32)
    fbonds = jax.random.normal(k2, (n_bonds, BOND_IN), dtype=jnp.float32)
    agraph = jax.random.randint(k3, (n_atoms, max_nb), 0, n_bonds)
    bgraph = jax.random.randint(k4, (n_bonds, max_nb), 0, n_bonds)

    params = {
        "W_i": 0.1 * jax.random.normal(k5, (BOND_IN, hidden_size), jnp.float32),
        "W_h": 0.1 * jax.random.normal(k6, (hidden_size, hidden_size), jnp.float32),
        "W_o": 0.1 * jax.random.normal(k7, (ATOM_FDIM + hidden_size, hidden_size), jnp.float32),
        "b_o": 0.1 * jax.random.normal(k8, (hidden_size,), jnp.float32),
    }

    out = mpn_forward(fatoms, fbonds, agraph, bgraph, scope, params, depth)
    out = jax.block_until_ready(out)
    assert out.shape == (len(scope), hidden_size)

    # 1) Strict correctness: kernel vs the identical bf16/padded formulation in XLA.
    ref_match = mpn_matched_reference(fatoms, fbonds, agraph, bgraph, scope,
                                      params, depth)
    err_match = jnp.max(jnp.abs(out - ref_match))
    assert jnp.allclose(out, ref_match, atol=1e-3, rtol=1e-3), \
        f"kernel vs matched-reference max abs err = {err_match}"

    # 2) Sanity: bf16-compute kernel vs pure-f32 PyTorch-mirroring reference
    #    (tolerance relaxed for the bf16 input/weight casts, per design).
    ref_f32 = mpn_reference(fatoms, fbonds, agraph, bgraph, scope, params, depth)
    err_f32 = jnp.max(jnp.abs(out - ref_f32))
    assert jnp.allclose(out, ref_f32, atol=2e-1, rtol=2e-1), \
        f"kernel (bf16) vs f32 reference max abs err = {err_f32}"

    print("KERNEL_OK")
</pallas_src>

<mosaic_0001>
module attributes {stable_mosaic.version = 11 : i64} {
  func.func @mpn_kernel(%arg0: memref<24x256xbf16, #tpu.memory_space<vmem>>, %arg1: memref<16x256xbf16, #tpu.memory_space<vmem>>, %arg2: memref<24x24xbf16, #tpu.memory_space<vmem>>, %arg3: memref<16x24xbf16, #tpu.memory_space<vmem>>, %arg4: memref<8x16xbf16, #tpu.memory_space<vmem>>, %arg5: memref<8x1xf32, #tpu.memory_space<vmem>>, %arg6: memref<256x128xbf16, #tpu.memory_space<vmem>>, %arg7: memref<128x128xbf16, #tpu.memory_space<vmem>>, %arg8: memref<256x128xbf16, #tpu.memory_space<vmem>>, %arg9: memref<128x128xbf16, #tpu.memory_space<vmem>>, %arg10: memref<1x128xf32, #tpu.memory_space<vmem>>, %arg11: memref<8x128xf32, #tpu.memory_space<vmem>>) attributes {dimension_semantics = [], scalar_prefetch = 0 : i64, scratch_operands = 0 : i64, tpu.core_type = #tpu.core_type<tc>} {
    %c0 = arith.constant 0 : index
    %c0_0 = arith.constant 0 : index
    %0 = vector.load %arg0[%c0, %c0_0] : memref<24x256xbf16, #tpu.memory_space<vmem>>, vector<24x256xbf16>
    %c0_1 = arith.constant 0 : index
    %c0_2 = arith.constant 0 : index
    %1 = vector.load %arg6[%c0_1, %c0_2] : memref<256x128xbf16, #tpu.memory_space<vmem>>, vector<256x128xbf16>
    %cst = arith.constant dense<0.000000e+00> : vector<24x128xf32>
    %2 = tpu.matmul %0, %1, %cst {dimension_numbers = #tpu.dot_dimension_numbers<[1], [0], [0], [1], [0, 0, 1, 1], [], []>} : vector<24x256xbf16>, vector<256x128xbf16>, vector<24x128xf32> -> vector<24x128xf32>
    %cst_3 = arith.constant 0.000000e+00 : f32
    %3 = vector.broadcast %cst_3 : f32 to vector<24x128xf32>
    %4 = arith.maximumf %2, %3 : vector<24x128xf32>
    %c0_i32 = arith.constant 0 : i32
    %c0_4 = arith.constant 0 : index
    %c0_5 = arith.constant 0 : index
    %5 = vector.load %arg2[%c0_4, %c0_5] : memref<24x24xbf16, #tpu.memory_space<vmem>>, vector<24x24xbf16>
    %6 = arith.truncf %4 : vector<24x128xf32> to vector<24x128xbf16>
    %cst_6 = arith.constant dense<0.000000e+00> : vector<24x128xf32>
    %7 = tpu.matmul %5, %6, %cst_6 {dimension_numbers = #tpu.dot_dimension_numbers<[1], [0], [0], [1], [0, 0, 1, 1], [], []>} : vector<24x24xbf16>, vector<24x128xbf16>, vector<24x128xf32> -> vector<24x128xf32>
    %8 = arith.truncf %7 : vector<24x128xf32> to vector<24x128xbf16>
    %c0_7 = arith.constant 0 : index
    %c0_8 = arith.constant 0 : index
    %9 = vector.load %arg7[%c0_7, %c0_8] : memref<128x128xbf16, #tpu.memory_space<vmem>>, vector<128x128xbf16>
    %cst_9 = arith.constant dense<0.000000e+00> : vector<24x128xf32>
    %10 = tpu.matmul %8, %9, %cst_9 {dimension_numbers = #tpu.dot_dimension_numbers<[1], [0], [0], [1], [0, 0, 1, 1], [], []>} : vector<24x128xbf16>, vector<128x128xbf16>, vector<24x128xf32> -> vector<24x128xf32>
    %11 = arith.addf %2, %10 : vector<24x128xf32>
    %cst_10 = arith.constant 0.000000e+00 : f32
    %12 = vector.broadcast %cst_10 : f32 to vector<24x128xf32>
    %13 = arith.maximumf %11, %12 : vector<24x128xf32>
    %c1_i32 = arith.constant 1 : i32
    %c0_11 = arith.constant 0 : index
    %c0_12 = arith.constant 0 : index
    %14 = vector.load %arg2[%c0_11, %c0_12] : memref<24x24xbf16, #tpu.memory_space<vmem>>, vector<24x24xbf16>
    %15 = arith.truncf %13 : vector<24x128xf32> to vector<24x128xbf16>
    %cst_13 = arith.constant dense<0.000000e+00> : vector<24x128xf32>
    %16 = tpu.matmul %14, %15, %cst_13 {dimension_numbers = #tpu.dot_dimension_numbers<[1], [0], [0], [1], [0, 0, 1, 1], [], []>} : vector<24x24xbf16>, vector<24x128xbf16>, vector<24x128xf32> -> vector<24x128xf32>
    %17 = arith.truncf %16 : vector<24x128xf32> to vector<24x128xbf16>
    %c0_14 = arith.constant 0 : index
    %c0_15 = arith.constant 0 : index
    %18 = vector.load %arg7[%c0_14, %c0_15] : memref<128x128xbf16, #tpu.memory_space<vmem>>, vector<128x128xbf16>
    %cst_16 = arith.constant dense<0.000000e+00> : vector<24x128xf32>
    %19 = tpu.matmul %17, %18, %cst_16 {dimension_numbers = #tpu.dot_dimension_numbers<[1], [0], [0], [1], [0, 0, 1, 1], [], []>} : vector<24x128xbf16>, vector<128x128xbf16>, vector<24x128xf32> -> vector<24x128xf32>
    %20 = arith.addf %2, %19 : vector<24x128xf32>
    %cst_17 = arith.constant 0.000000e+00 : f32
    %21 = vector.broadcast %cst_17 : f32 to vector<24x128xf32>
    %22 = arith.maximumf %20, %21 : vector<24x128xf32>
    %c0_18 = arith.constant 0 : index
    %c0_19 = arith.constant 0 : index
    %23 = vector.load %arg3[%c0_18, %c0_19] : memref<16x24xbf16, #tpu.memory_space<vmem>>, vector<16x24xbf16>
    %24 = arith.truncf %22 : vector<24x128xf32> to vector<24x128xbf16>
    %cst_20 = arith.constant dense<0.000000e+00> : vector<16x128xf32>
    %25 = tpu.matmul %23, %24, %cst_20 {dimension_numbers = #tpu.dot_dimension_numbers<[1], [0], [0], [1], [0, 0, 1, 1], [], []>} : vector<16x24xbf16>, vector<24x128xbf16>, vector<16x128xf32> -> vector<16x128xf32>
    %c0_21 = arith.constant 0 : index
    %c0_22 = arith.constant 0 : index
    %26 = vector.load %arg1[%c0_21, %c0_22] : memref<16x256xbf16, #tpu.memory_space<vmem>>, vector<16x256xbf16>
    %c0_23 = arith.constant 0 : index
    %c0_24 = arith.constant 0 : index
    %27 = vector.load %arg8[%c0_23, %c0_24] : memref<256x128xbf16, #tpu.memory_space<vmem>>, vector<256x128xbf16>
    %cst_25 = arith.constant dense<0.000000e+00> : vector<16x128xf32>
    %28 = tpu.matmul %26, %27, %cst_25 {dimension_numbers = #tpu.dot_dimension_numbers<[1], [0], [0], [1], [0, 0, 1, 1], [], []>} : vector<16x256xbf16>, vector<256x128xbf16>, vector<16x128xf32> -> vector<16x128xf32>
    %29 = arith.truncf %25 : vector<16x128xf32> to vector<16x128xbf16>
    %c0_26 = arith.constant 0 : index
    %c0_27 = arith.constant 0 : index
    %30 = vector.load %arg9[%c0_26, %c0_27] : memref<128x128xbf16, #tpu.memory_space<vmem>>, vector<128x128xbf16>
    %cst_28 = arith.constant dense<0.000000e+00> : vector<16x128xf32>
    %31 = tpu.matmul %29, %30, %cst_28 {dimension_numbers = #tpu.dot_dimension_numbers<[1], [0], [0], [1], [0, 0, 1, 1], [], []>} : vector<16x128xbf16>, vector<128x128xbf16>, vector<16x128xf32> -> vector<16x128xf32>
    %32 = arith.addf %28, %31 : vector<16x128xf32>
    %c0_29 = arith.constant 0 : index
    %c0_30 = arith.constant 0 : index
    %33 = vector.load %arg10[%c0_29, %c0_30] : memref<1x128xf32, #tpu.memory_space<vmem>>, vector<1x128xf32>
    %34 = vector.broadcast %33 : vector<1x128xf32> to vector<16x128xf32>
    %35 = arith.addf %32, %34 : vector<16x128xf32>
    %cst_31 = arith.constant 0.000000e+00 : f32
    %36 = vector.broadcast %cst_31 : f32 to vector<16x128xf32>
    %37 = arith.maximumf %35, %36 : vector<16x128xf32>
    %c0_32 = arith.constant 0 : index
    %c0_33 = arith.constant 0 : index
    %38 = vector.load %arg4[%c0_32, %c0_33] : memref<8x16xbf16, #tpu.memory_space<vmem>>, vector<8x16xbf16>
    %39 = arith.truncf %37 : vector<16x128xf32> to vector<16x128xbf16>
    %cst_34 = arith.constant dense<0.000000e+00> : vector<8x128xf32>
    %40 = tpu.matmul %38, %39, %cst_34 {dimension_numbers = #tpu.dot_dimension_numbers<[1], [0], [0], [1], [0, 0, 1, 1], [], []>} : vector<8x16xbf16>, vector<16x128xbf16>, vector<8x128xf32> -> vector<8x128xf32>
    %c0_35 = arith.constant 0 : index
    %c0_36 = arith.constant 0 : index
    %41 = vector.load %arg5[%c0_35, %c0_36] : memref<8x1xf32, #tpu.memory_space<vmem>>, vector<8x1xf32>
    %42 = vector.broadcast %41 : vector<8x1xf32> to vector<8x128xf32>
    %43 = arith.mulf %40, %42 : vector<8x128xf32>
    %c0_37 = arith.constant 0 : index
    %c0_38 = arith.constant 0 : index
    %44 = vector.load %arg11[%c0_37, %c0_38] : memref<8x128xf32, #tpu.memory_space<vmem>>, vector<8x128xf32>
    tpu.vector_store %arg11[%c0_37, %c0_38], %43 {strides = array<i32>} : memref<8x128xf32, #tpu.memory_space<vmem>>, vector<8x128xf32>,
    return
  }
}

</mosaic_0001>

<llo_original>
// kernel: tpu_custom_call.1
$region0: #{tpu_custom_call.1}
  #allocation0 [shape = 'u32[]', space=smem, size = 0x4, offset = 0x4, fixed_abs, tag = 'smem constant byte address 0x4 - core index']
  #allocation1 [shape = 'u32[144,128]{1,0:T(1,128)}', space=vmem, size = 0x12000, scoped, tag = 'internal scratch']
  %s0 = inlined_call_operand.hbm [shape: bf16[24,256], index: 0, kind: input, shape index: {}]
  %s1 = inlined_call_operand.hbm [shape: bf16[16,256], index: 1, kind: input, shape index: {}]
  %s2 = inlined_call_operand.vmem [shape: bf16[24,24], index: 2, kind: input, shape index: {}]
  %s3 = inlined_call_operand.vmem [shape: bf16[16,24], index: 3, kind: input, shape index: {}]
  %s4 = inlined_call_operand.vmem [shape: bf16[8,16], index: 4, kind: input, shape index: {}]
  %s5 = inlined_call_operand.vmem [shape: f32[8,1], index: 5, kind: input, shape index: {}]
  %s6 = inlined_call_operand.hbm [shape: bf16[256,128], index: 6, kind: input, shape index: {}]
  %s7 = inlined_call_operand.hbm [shape: bf16[128,128], index: 7, kind: input, shape index: {}]
  %s8 = inlined_call_operand.hbm [shape: bf16[256,128], index: 8, kind: input, shape index: {}]
  %s9 = inlined_call_operand.hbm [shape: bf16[128,128], index: 9, kind: input, shape index: {}]
  %s10 = inlined_call_operand.vmem [shape: f32[1,128], index: 10, kind: input, shape index: {}]
  %s11 = inlined_call_operand.hbm [shape: f32[8,128], index: 11, kind: output, shape index: {}]
  %s12 = sld [smem:[#allocation0]]
  $region78: #{tpu_custom_call.1} parent=0
    _
  %s14 = ssub.s32 1, %s12
  %s15 = scalar_select 0, %s14, %s12
  $region1: #{tpu_custom_call.1} parent=0
    #allocation2 [shape = 'u8[12288]{0}', space=vmem, size = 0x3000, scoped, tag = 'input window, operand 0, single buffered']
    #allocation3 [shape = 's32[1]{0}', space=sflag, size = 0x4, scoped, tag = 'scoped memory for tpu_custom_call.1']
    #allocation4 [shape = 's32[1]{0}', space=sflag, size = 0x4, scoped, tag = 'scoped memory for tpu_custom_call.1']
    #allocation5 [shape = 'u8[8192]{0}', space=vmem, size = 0x2000, scoped, tag = 'input window, operand 1, single buffered']
    #allocation6 [shape = 's32[1]{0}', space=sflag, size = 0x4, scoped, tag = 'scoped memory for tpu_custom_call.1']
    #allocation7 [shape = 'u8[65536]{0}', space=vmem, size = 0x10000, scoped, tag = 'input window, operand 6, single buffered']
    #allocation8 [shape = 'u8[32768]{0}', space=vmem, size = 0x8000, scoped, tag = 'input window, operand 7, single buffered']
    #allocation9 [shape = 's32[1]{0}', space=sflag, size = 0x4, scoped, tag = 'scoped memory for tpu_custom_call.1']
    #allocation10 [shape = 'u8[65536]{0}', space=vmem, size = 0x10000, scoped, tag = 'input window, operand 8, single buffered']
    #allocation11 [shape = 'u8[32768]{0}', space=vmem, size = 0x8000, scoped, tag = 'input window, operand 9, single buffered']
    #allocation12 [shape = 's32[1]{0}', space=sflag, size = 0x4, scoped, tag = 'scoped memory for tpu_custom_call.1']
    #allocation13 [shape = 'u8[4096]{0}', space=vmem, size = 0x1000, scoped, tag = 'output window, operand 0, single buffered']
    %16 = vsyncpa [#allocation3], 0
    %17 = vsyncpa [#allocation6], 0
    %18 = vsyncpa [#allocation9], 0
    %19 = vsyncpa [#allocation12], 0
    %20 = vsyncpa [#allocation4], 0
    // Predicated region
    $region2: #{tpu_custom_call.1} parent=1 // pred_check
      _
    $region3: #{tpu_custom_call.1} parent=1 // pred_check_branch
      %22 = sbr.rel (0) target = $region5
    $region4: #{tpu_custom_call.1} parent=1 // pred_region
      %s24 = ssub.s32 384, 384
      %25 = vsyncadd [#allocation3], %s24
      %s26 = sshll.u32 [#allocation2], 4
      %s27 = int_to_ptr.vmem [resolvable:$true] %s26
      %32 = dma.hbm_to_vmem [thread:$0]  %s0, 384, %s27, [#allocation3], 128, 128, 8
    $region5: #{tpu_custom_call.1} parent=1 // pred_fallthru
      _
    // Predicated region
    $region6: #{tpu_custom_call.1} parent=1 // pred_check
      _
    $region7: #{tpu_custom_call.1} parent=1 // pred_check_branch
      %34 = sbr.rel (0) target = $region9
    $region8: #{tpu_custom_call.1} parent=1 // pred_region
      %s36 = ssub.s32 256, 256
      %37 = vsyncadd [#allocation6], %s36
      %s38 = sshll.u32 [#allocation5], 4
      %s39 = int_to_ptr.vmem [resolvable:$true] %s38
      %44 = dma.hbm_to_vmem [thread:$0]  %s1, 256, %s39, [#allocation6], 128, 128, 8
    $region9: #{tpu_custom_call.1} parent=1 // pred_fallthru
      _
    // Predicated region
    $region10: #{tpu_custom_call.1} parent=1 // pred_check
      _
    $region11: #{tpu_custom_call.1} parent=1 // pred_check_branch
      %46 = sbr.rel (0) target = $region13
    $region12: #{tpu_custom_call.1} parent=1 // pred_region
      _
    $region13: #{tpu_custom_call.1} parent=1 // pred_fallthru
      _
    // Predicated region
    $region14: #{tpu_custom_call.1} parent=1 // pred_check
      _
    $region15: #{tpu_custom_call.1} parent=1 // pred_check_branch
      %48 = sbr.rel (0) target = $region17
    $region16: #{tpu_custom_call.1} parent=1 // pred_region
      _
    $region17: #{tpu_custom_call.1} parent=1 // pred_fallthru
      _
    // Predicated region
    $region18: #{tpu_custom_call.1} parent=1 // pred_check
      _
    $region19: #{tpu_custom_call.1} parent=1 // pred_check_branch
      %50 = sbr.rel (0) target = $region21
    $region20: #{tpu_custom_call.1} parent=1 // pred_region
      _
    $region21: #{tpu_custom_call.1} parent=1 // pred_fallthru
      _
    // Predicated region
    $region22: #{tpu_custom_call.1} parent=1 // pred_check
      _
    $region23: #{tpu_custom_call.1} parent=1 // pred_check_branch
      %52 = sbr.rel (0) target = $region25
    $region24: #{tpu_custom_call.1} parent=1 // pred_region
      _
    $region25: #{tpu_custom_call.1} parent=1 // pred_fallthru
      _
    // Predicated region
    $region26: #{tpu_custom_call.1} parent=1 // pred_check
      _
    $region27: #{tpu_custom_call.1} parent=1 // pred_check_branch
      %54 = sbr.rel (0) target = $region29
    $region28: #{tpu_custom_call.1} parent=1 // pred_region
      %s56 = ssub.s32 2048, 2048
      %57 = vsyncadd [#allocation6], %s56
      %s58 = sshll.u32 [#allocation7], 4
      %s59 = int_to_ptr.vmem [resolvable:$true] %s58
      %64 = dma.hbm_to_vmem [thread:$0]  %s6, 2048, %s59, [#allocation6], 64, 64, 4
    $region29: #{tpu_custom_call.1} parent=1 // pred_fallthru
      _
    // Predicated region
    $region30: #{tpu_custom_call.1} parent=1 // pred_check
      _
    $region31: #{tpu_custom_call.1} parent=1 // pred_check_branch
      %66 = sbr.rel (0) target = $region33
    $region32: #{tpu_custom_call.1} parent=1 // pred_region
      %s68 = ssub.s32 1024, 1024
      %69 = vsyncadd [#allocation9], %s68
      %s70 = sshll.u32 [#allocation8], 4
      %s71 = int_to_ptr.vmem [resolvable:$true] %s70
      %76 = dma.hbm_to_vmem [thread:$0]  %s7, 1024, %s71, [#allocation9], 64, 64, 4
    $region33: #{tpu_custom_call.1} parent=1 // pred_fallthru
      _
    // Predicated region
    $region34: #{tpu_custom_call.1} parent=1 // pred_check
      _
    $region35: #{tpu_custom_call.1} parent=1 // pred_check_branch
      %78 = sbr.rel (0) target = $region37
    $region36: #{tpu_custom_call.1} parent=1 // pred_region
      %s80 = ssub.s32 2048, 2048
      %81 = vsyncadd [#allocation9], %s80
      %s82 = sshll.u32 [#allocation10], 4
      %s83 = int_to_ptr.vmem [resolvable:$true] %s82
      %88 = dma.hbm_to_vmem [thread:$0]  %s8, 2048, %s83, [#allocation9], 64, 64, 4
    $region37: #{tpu_custom_call.1} parent=1 // pred_fallthru
      _
    // Predicated region
    $region38: #{tpu_custom_call.1} parent=1 // pred_check
      _
    $region39: #{tpu_custom_call.1} parent=1 // pred_check_branch
      %90 = sbr.rel (0) target = $region41
    $region40: #{tpu_custom_call.1} parent=1 // pred_region
      %s92 = ssub.s32 1024, 1024
      %93 = vsyncadd [#allocation12], %s92
      %s94 = sshll.u32 [#allocation11], 4
      %s95 = int_to_ptr.vmem [resolvable:$true] %s94
      %100 = dma.hbm_to_vmem [thread:$0]  %s9, 1024, %s95, [#allocation12], 64, 64, 4
    $region41: #{tpu_custom_call.1} parent=1 // pred_fallthru
      _
    // Predicated region
    $region42: #{tpu_custom_call.1} parent=1 // pred_check
      _
    $region43: #{tpu_custom_call.1} parent=1 // pred_check_branch
      %102 = sbr.rel (0) target = $region45
    $region44: #{tpu_custom_call.1} parent=1 // pred_region
      _
    $region45: #{tpu_custom_call.1} parent=1 // pred_fallthru
      _
    // Predicated region
    $region46: #{tpu_custom_call.1} parent=1 // pred_check
      _
    $region47: #{tpu_custom_call.1} parent=1 // pred_check_branch
      %104 = sbr.rel (0) target = $region49
    $region48: #{tpu_custom_call.1} parent=1 // pred_region
      %105 = dma.done [#allocation3], 384
    $region49: #{tpu_custom_call.1} parent=1 // pred_fallthru
      _
    // Predicated region
    $region50: #{tpu_custom_call.1} parent=1 // pred_check
      _
    $region51: #{tpu_custom_call.1} parent=1 // pred_check_branch
      %107 = sbr.rel (0) target = $region53
    $region52: #{tpu_custom_call.1} parent=1 // pred_region
      %108 = dma.done [#allocation6], 256
    $region53: #{tpu_custom_call.1} parent=1 // pred_fallthru
      _
    // Predicated region
    $region54: #{tpu_custom_call.1} parent=1 // pred_check
      _
    $region55: #{tpu_custom_call.1} parent=1 // pred_check_branch
      %110 = sbr.rel (0) target = $region57
    $region56: #{tpu_custom_call.1} parent=1 // pred_region
      %111 = dma.done [#allocation6], 2048
    $region57: #{tpu_custom_call.1} parent=1 // pred_fallthru
      _
    // Predicated region
    $region58: #{tpu_custom_call.1} parent=1 // pred_check
      _
    $region59: #{tpu_custom_call.1} parent=1 // pred_check_branch
      %113 = sbr.rel (0) target = $region61
    $region60: #{tpu_custom_call.1} parent=1 // pred_region
      %114 = dma.done [#allocation9], 1024
    $region61: #{tpu_custom_call.1} parent=1 // pred_fallthru
      _
    // Predicated region
    $region62: #{tpu_custom_call.1} parent=1 // pred_check
      _
    $region63: #{tpu_custom_call.1} parent=1 // pred_check_branch
      %116 = sbr.rel (0) target = $region65
    $region64: #{tpu_custom_call.1} parent=1 // pred_region
      %117 = dma.done [#allocation9], 2048
    $region65: #{tpu_custom_call.1} parent=1 // pred_fallthru
      _
    // Predicated region
    $region66: #{tpu_custom_call.1} parent=1 // pred_check
      _
    $region67: #{tpu_custom_call.1} parent=1 // pred_check_branch
      %119 = sbr.rel (0) target = $region69
    $region68: #{tpu_custom_call.1} parent=1 // pred_region
      %120 = dma.done [#allocation12], 1024
    $region69: #{tpu_custom_call.1} parent=1 // pred_fallthru
      _
    %v122 = vld [vmem:[#allocation2] sm:$0xff]
    %v123 = vld [vmem:[#allocation2 + $0x8] sm:$0xff]
    %v124 = vld [vmem:[#allocation2 + $0x10] sm:$0xff]
    %v125 = vld [vmem:[#allocation7] sm:$0xf]
    %v126 = vld [vmem:[#allocation7 + $0x4] sm:$0xf]
    %v127 = vld [vmem:[#allocation7 + $0x8] sm:$0xf]
    %v128 = vld [vmem:[#allocation7 + $0xc] sm:$0xf]
    %v129 = vld [vmem:[#allocation7 + $0x10] sm:$0xf]
    %v130 = vld [vmem:[#allocation7 + $0x14] sm:$0xf]
    %v131 = vld [vmem:[#allocation7 + $0x18] sm:$0xf]
    %v132 = vld [vmem:[#allocation7 + $0x1c] sm:$0xf]
    %v133 = vld [vmem:[#allocation7 + $0x20] sm:$0xf]
    %v134 = vld [vmem:[#allocation7 + $0x24] sm:$0xf]
    %v135 = vld [vmem:[#allocation7 + $0x28] sm:$0xf]
    %v136 = vld [vmem:[#allocation7 + $0x2c] sm:$0xf]
    %v137 = vld [vmem:[#allocation7 + $0x30] sm:$0xf]
    %v138 = vld [vmem:[#allocation7 + $0x34] sm:$0xf]
    %v139 = vld [vmem:[#allocation7 + $0x38] sm:$0xf]
    %v140 = vld [vmem:[#allocation7 + $0x3c] sm:$0xf]
    %v141 = vld [vmem:[#allocation7 + $0x40] sm:$0xf]
    %v142 = vld [vmem:[#allocation7 + $0x44] sm:$0xf]
    %v143 = vld [vmem:[#allocation7 + $0x48] sm:$0xf]
    %v144 = vld [vmem:[#allocation7 + $0x4c] sm:$0xf]
    %v145 = vld [vmem:[#allocation7 + $0x50] sm:$0xf]
    %v146 = vld [vmem:[#allocation7 + $0x54] sm:$0xf]
    %v147 = vld [vmem:[#allocation7 + $0x58] sm:$0xf]
    %v148 = vld [vmem:[#allocation7 + $0x5c] sm:$0xf]
    %v149 = vld [vmem:[#allocation7 + $0x60] sm:$0xf]
    %v150 = vld [vmem:[#allocation7 + $0x64] sm:$0xf]
    %v151 = vld [vmem:[#allocation7 + $0x68] sm:$0xf]
    %v152 = vld [vmem:[#allocation7 + $0x6c] sm:$0xf]
    %v153 = vld [vmem:[#allocation7 + $0x70] sm:$0xf]
    %v154 = vld [vmem:[#allocation7 + $0x74] sm:$0xf]
    %v155 = vld [vmem:[#allocation7 + $0x78] sm:$0xf]
    %v156 = vld [vmem:[#allocation7 + $0x7c] sm:$0xf]
    %v160 = vunpack.c.l.b16 %v122
    %v161 = vunpack.c.h.b16 %v122
    %v162 = vunpack.c.l.b16 %v123
    %v163 = vunpack.c.h.b16 %v123
    %v164 = vunpack.c.l.b16 %v124
    %v165 = vunpack.c.h.b16 %v124
    %v166 = vpack.c.b16 %v162, %v160
    %v167 = vpack.c.b16 %v163, %v161
    %v168 = vpack.c.b16 %v164, %v164
    %v169 = vpack.c.b16 %v165, %v165
    %v206 = vunpack.c.l.b16 %v125
    %v207 = vunpack.c.l.b16 %v126
    %v208 = vunpack.c.l.b16 %v127
    %v209 = vunpack.c.l.b16 %v128
    %v210 = vunpack.c.l.b16 %v129
    %v211 = vunpack.c.l.b16 %v130
    %v212 = vunpack.c.l.b16 %v131
    %v213 = vunpack.c.l.b16 %v132
    %v214 = vunpack.c.l.b16 %v133
    %v215 = vunpack.c.l.b16 %v134
    %v216 = vunpack.c.l.b16 %v135
    %v217 = vunpack.c.l.b16 %v136
    %v218 = vunpack.c.l.b16 %v137
    %v219 = vunpack.c.l.b16 %v138
    %v220 = vunpack.c.l.b16 %v139
    %v221 = vunpack.c.l.b16 %v140
    %v222 = vunpack.c.l.b16 %v141
    %v223 = vunpack.c.l.b16 %v142
    %v224 = vunpack.c.l.b16 %v143
    %v225 = vunpack.c.l.b16 %v144
    %v226 = vunpack.c.l.b16 %v145
    %v227 = vunpack.c.l.b16 %v146
    %v228 = vunpack.c.l.b16 %v147
    %v229 = vunpack.c.l.b16 %v148
    %v230 = vunpack.c.l.b16 %v149
    %v231 = vunpack.c.l.b16 %v150
    %v232 = vunpack.c.l.b16 %v151
    %v233 = vunpack.c.l.b16 %v152
    %v234 = vunpack.c.l.b16 %v153
    %v235 = vunpack.c.l.b16 %v154
    %v236 = vunpack.c.l.b16 %v155
    %v237 = vunpack.c.l.b16 %v156
    %v238 = vpack.c.b16 %v207, %v206
    %v239 = vpack.c.b16 %v209, %v208
    %v240 = vpack.c.b16 %v211, %v210
    %v241 = vpack.c.b16 %v213, %v212
    %v242 = vpack.c.b16 %v215, %v214
    %v243 = vpack.c.b16 %v217, %v216
    %v244 = vpack.c.b16 %v219, %v218
    %v245 = vpack.c.b16 %v221, %v220
    %v246 = vpack.c.b16 %v223, %v222
    %v247 = vpack.c.b16 %v225, %v224
    %v248 = vpack.c.b16 %v227, %v226
    %v249 = vpack.c.b16 %v229, %v228
    %v250 = vpack.c.b16 %v231, %v230
    %v251 = vpack.c.b16 %v233, %v232
    %v252 = vpack.c.b16 %v235, %v234
    %v253 = vpack.c.b16 %v237, %v236
    %270 = vmatprep.subr.bf16.mxu0 0
    %271 = vmatpush1.bf16.msra.mxu0 %v238
    %272 = vmatprep.subr.bf16.mxu0 0
    %273 = vmatpush1.bf16.msra.mxu0 %v239
    %274 = vmatprep.subr.bf16.mxu0 0
    %275 = vmatpush1.bf16.msra.mxu0 %v240
    %276 = vmatprep.subr.bf16.mxu0 0
    %277 = vmatpush1.bf16.msra.mxu0 %v241
    %278 = vmatprep.subr.bf16.mxu0 0
    %279 = vmatpush1.bf16.msra.mxu0 %v242
    %280 = vmatprep.subr.bf16.mxu0 0
    %281 = vmatpush1.bf16.msra.mxu0 %v243
    %282 = vmatprep.subr.bf16.mxu0 0
    %283 = vmatpush1.bf16.msra.mxu0 %v244
    %284 = vmatprep.subr.bf16.mxu0 0
    %285 = vmatpush1.bf16.msra.mxu0 %v245
    %286 = vmatprep.subr.bf16.mxu0 0
    %287 = vmatpush1.bf16.msra.mxu0 %v246
    %288 = vmatprep.subr.bf16.mxu0 0
    %289 = vmatpush1.bf16.msra.mxu0 %v247
    %290 = vmatprep.subr.bf16.mxu0 0
    %291 = vmatpush1.bf16.msra.mxu0 %v248
    %292 = vmatprep.subr.bf16.mxu0 0
    %293 = vmatpush1.bf16.msra.mxu0 %v249
    %294 = vmatprep.subr.bf16.mxu0 0
    %295 = vmatpush1.bf16.msra.mxu0 %v250
    %296 = vmatprep.subr.bf16.mxu0 0
    %297 = vmatpush1.bf16.msra.mxu0 %v251
    %298 = vmatprep.subr.bf16.mxu0 0
    %299 = vmatpush1.bf16.msra.mxu0 %v252
    %300 = vmatprep.subr.bf16.mxu0 0
    %301 = vmatpush1.bf16.msra.mxu0 %v253
    %302 = vmatprep.mubr.bf16.mxu0 %v167
    %303 = vmatmul.mubr.bf16.gmra.mrb[0].mxu0 %v166
    %v304 = vpop.f32.mrb[0].mxu0
    %v305 = vadd.f32 0.0, %v304
    %v306 = vpop.f32.mrb[0].mxu0
    %v307 = vpop.f32.mrb[0].mxu0
    %v308 = vadd.f32 0.0, %v307
    %v309 = vpop.f32.mrb[0].mxu0
    %310 = vmatprep.mubr.bf16.mxu0 %v169
    %311 = vmatmul.mubr.bf16.gmra.mrb[0].mxu0 %v168
    %v312 = vpop.f32.mrb[0].mxu0
    %v313 = vadd.f32 0.0, %v312
    %v314 = vpop.f32.mrb[0].mxu0
    %v315 = vpop.f32.mrb[0].mxu0
    %v316 = vpop.f32.mrb[0].mxu0
    %317 = vdwg.mxu0
    %v318 = vmax.f32 %v305, 0.0
    %v319 = vmax.f32 %v308, 0.0
    %v320 = vmax.f32 %v313, 0.0
    %v321 = vld [vmem:[%s2] sm:$0xf]
    %v322 = vld [vmem:[%s2 + $0x4] sm:$0xf]
    %v323 = vld [vmem:[%s2 + $0x8] sm:$0xf]
    %v324 = vpack.c.bf16 %v319, %v318
    %v325 = vpack.c.bf16 %v320, %v320
    %v329 = vunpack.c.l.b16 %v321
    %v330 = vunpack.c.l.b16 %v322
    %v331 = vunpack.c.l.b16 %v323
    %v332 = vpack.c.b16 %v330, %v329
    %v333 = vpack.c.b16 %v331, %v331
    %vm334 = vcmask 195584
    %v336 = vsel %vm334, %v332, 0
    %v339 = vsel %vm334, %v333, 0
    %vm341 = vcmask 1043456
    %v343 = vsel %vm341, %v325, 0
    %345 = vmatprep.subr.bf16.mxu0 0
    %346 = vmatpush1.bf16.msra.mxu0 %v324
    %347 = vmatprep.subr.bf16.mxu0 0
    %348 = vmatpush1.bf16.msra.mxu0 %v343
    %349 = vmatprep.subr.bf16.mxu0 0
    %350 = vmatpush1.bf16.msra.mxu0 0
    %351 = vmatprep.subr.bf16.mxu0 0
    %352 = vmatpush1.bf16.msra.mxu0 0
    %353 = vmatprep.subr.bf16.mxu0 0
    %354 = vmatpush1.bf16.msra.mxu0 0
    %355 = vmatprep.subr.bf16.mxu0 0
    %356 = vmatpush1.bf16.msra.mxu0 0
    %357 = vmatprep.subr.bf16.mxu0 0
    %358 = vmatpush1.bf16.msra.mxu0 0
    %359 = vmatprep.subr.bf16.mxu0 0
    %360 = vmatpush1.bf16.msra.mxu0 0
    %361 = vmatprep.subr.bf16.mxu0 0
    %362 = vmatpush1.bf16.msra.mxu0 0
    %363 = vmatprep.subr.bf16.mxu0 0
    %364 = vmatpush1.bf16.msra.mxu0 0
    %365 = vmatprep.subr.bf16.mxu0 0
    %366 = vmatpush1.bf16.msra.mxu0 0
    %367 = vmatprep.subr.bf16.mxu0 0
    %368 = vmatpush1.bf16.msra.mxu0 0
    %369 = vmatprep.subr.bf16.mxu0 0
    %370 = vmatpush1.bf16.msra.mxu0 0
    %371 = vmatprep.subr.bf16.mxu0 0
    %372 = vmatpush1.bf16.msra.mxu0 0
    %373 = vmatprep.subr.bf16.mxu0 0
    %374 = vmatpush1.bf16.msra.mxu0 0
    %375 = vmatprep.subr.bf16.mxu0 0
    %376 = vmatpush1.bf16.msra.mxu0 0
    %377 = vmatprep.mubr.bf16.mxu0 0
    %378 = vmatmul.mubr.bf16.gmra.mrb[0].mxu0 %v336
    %v379 = vpop.f32.mrb[0].mxu0
    %v380 = vadd.f32 0.0, %v379
    %v381 = vpop.f32.mrb[0].mxu0
    %v382 = vpop.f32.mrb[0].mxu0
    %v383 = vadd.f32 0.0, %v382
    %v384 = vpop.f32.mrb[0].mxu0
    %385 = vmatprep.mubr.bf16.mxu0 0
    %386 = vmatmul.mubr.bf16.gmra.mrb[0].mxu0 %v339
    %v387 = vpop.f32.mrb[0].mxu0
    %v388 = vadd.f32 0.0, %v387
    %v389 = vpop.f32.mrb[0].mxu0
    %v390 = vpop.f32.mrb[0].mxu0
    %v391 = vpop.f32.mrb[0].mxu0
    %392 = vdwg.mxu0
    %v393 = vpack.c.bf16 %v383, %v380
    %v394 = vpack.c.bf16 %v388, %v388
    %v395 = vld [vmem:[#allocation8] sm:$0xf]
    %v396 = vld [vmem:[#allocation8 + $0x4] sm:$0xf]
    %v397 = vld [vmem:[#allocation8 + $0x8] sm:$0xf]
    %v398 = vld [vmem:[#allocation8 + $0xc] sm:$0xf]
    %v399 = vld [vmem:[#allocation8 + $0x10] sm:$0xf]
    %v400 = vld [vmem:[#allocation8 + $0x14] sm:$0xf]
    %v401 = vld [vmem:[#allocation8 + $0x18] sm:$0xf]
    %v402 = vld [vmem:[#allocation8 + $0x1c] sm:$0xf]
    %v403 = vld [vmem:[#allocation8 + $0x20] sm:$0xf]
    %v404 = vld [vmem:[#allocation8 + $0x24] sm:$0xf]
    %v405 = vld [vmem:[#allocation8 + $0x28] sm:$0xf]
    %v406 = vld [vmem:[#allocation8 + $0x2c] sm:$0xf]
    %v407 = vld [vmem:[#allocation8 + $0x30] sm:$0xf]
    %v408 = vld [vmem:[#allocation8 + $0x34] sm:$0xf]
    %v409 = vld [vmem:[#allocation8 + $0x38] sm:$0xf]
    %v410 = vld [vmem:[#allocation8 + $0x3c] sm:$0xf]
    %v427 = vunpack.c.l.b16 %v395
    %v428 = vunpack.c.l.b16 %v396
    %v429 = vunpack.c.l.b16 %v397
    %v430 = vunpack.c.l.b16 %v398
    %v431 = vunpack.c.l.b16 %v399
    %v432 = vunpack.c.l.b16 %v400
    %v433 = vunpack.c.l.b16 %v401
    %v434 = vunpack.c.l.b16 %v402
    %v435 = vunpack.c.l.b16 %v403
    %v436 = vunpack.c.l.b16 %v404
    %v437 = vunpack.c.l.b16 %v405
    %v438 = vunpack.c.l.b16 %v406
    %v439 = vunpack.c.l.b16 %v407
    %v440 = vunpack.c.l.b16 %v408
    %v441 = vunpack.c.l.b16 %v409
    %v442 = vunpack.c.l.b16 %v410
    %v443 = vpack.c.b16 %v428, %v427
    %v444 = vpack.c.b16 %v430, %v429
    %v445 = vpack.c.b16 %v432, %v431
    %v446 = vpack.c.b16 %v434, %v433
    %v447 = vpack.c.b16 %v436, %v435
    %v448 = vpack.c.b16 %v438, %v437
    %v449 = vpack.c.b16 %v440, %v439
    %v450 = vpack.c.b16 %v442, %v441
    %459 = vmatprep.subr.bf16.mxu0 0
    %460 = vmatpush1.bf16.msra.mxu0 %v443
    %461 = vmatprep.subr.bf16.mxu0 0
    %462 = vmatpush1.bf16.msra.mxu0 %v444
    %463 = vmatprep.subr.bf16.mxu0 0
    %464 = vmatpush1.bf16.msra.mxu0 %v445
    %465 = vmatprep.subr.bf16.mxu0 0
    %466 = vmatpush1.bf16.msra.mxu0 %v446
    %467 = vmatprep.subr.bf16.mxu0 0
    %468 = vmatpush1.bf16.msra.mxu0 %v447
    %469 = vmatprep.subr.bf16.mxu0 0
    %470 = vmatpush1.bf16.msra.mxu0 %v448
    %471 = vmatprep.subr.bf16.mxu0 0
    %472 = vmatpush1.bf16.msra.mxu0 %v449
    %473 = vmatprep.subr.bf16.mxu0 0
    %474 = vmatpush1.bf16.msra.mxu0 %v450
    %475 = vmatprep.subr.bf16.mxu0 0
    %476 = vmatpush1.bf16.msra.mxu0 0
    %477 = vmatprep.subr.bf16.mxu0 0
    %478 = vmatpush1.bf16.msra.mxu0 0
    %479 = vmatprep.subr.bf16.mxu0 0
    %480 = vmatpush1.bf16.msra.mxu0 0
    %481 = vmatprep.subr.bf16.mxu0 0
    %482 = vmatpush1.bf16.msra.mxu0 0
    %483 = vmatprep.subr.bf16.mxu0 0
    %484 = vmatpush1.bf16.msra.mxu0 0
    %485 = vmatprep.subr.bf16.mxu0 0
    %486 = vmatpush1.bf16.msra.mxu0 0
    %487 = vmatprep.subr.bf16.mxu0 0
    %488 = vmatpush1.bf16.msra.mxu0 0
    %489 = vmatprep.subr.bf16.mxu0 0
    %490 = vmatpush1.bf16.msra.mxu0 0
    %491 = vmatprep.mubr.bf16.mxu0 0
    %492 = vmatmul.mubr.bf16.gmra.mrb[0].mxu0 %v393
    %v493 = vpop.f32.mrb[0].mxu0
    %v494 = vadd.f32 0.0, %v493
    %v495 = vpop.f32.mrb[0].mxu0
    %v496 = vpop.f32.mrb[0].mxu0
    %v497 = vadd.f32 0.0, %v496
    %v498 = vpop.f32.mrb[0].mxu0
    %499 = vmatprep.mubr.bf16.mxu0 0
    %500 = vmatmul.mubr.bf16.gmra.mrb[0].mxu0 %v394
    %v501 = vpop.f32.mrb[0].mxu0
    %v502 = vadd.f32 0.0, %v501
    %v503 = vpop.f32.mrb[0].mxu0
    %v504 = vpop.f32.mrb[0].mxu0
    %v505 = vpop.f32.mrb[0].mxu0
    %506 = vdwg.mxu0
    %v507 = vadd.f32 %v305, %v494
    %v508 = vadd.f32 %v308, %v497
    %v509 = vadd.f32 %v313, %v502
    %v510 = vmax.f32 %v507, 0.0
    %v511 = vmax.f32 %v508, 0.0
    %v512 = vmax.f32 %v509, 0.0
    %v513 = vpack.c.bf16 %v511, %v510
    %v514 = vpack.c.bf16 %v512, %v512
    %v516 = vsel %vm341, %v514, 0
    %518 = vmatprep.subr.bf16.mxu0 0
    %519 = vmatpush1.bf16.msra.mxu0 %v513
    %520 = vmatprep.subr.bf16.mxu0 0
    %521 = vmatpush1.bf16.msra.mxu0 %v516
    %522 = vmatprep.subr.bf16.mxu0 0
    %523 = vmatpush1.bf16.msra.mxu0 0
    %524 = vmatprep.subr.bf16.mxu0 0
    %525 = vmatpush1.bf16.msra.mxu0 0
    %526 = vmatprep.subr.bf16.mxu0 0
    %527 = vmatpush1.bf16.msra.mxu0 0
    %528 = vmatprep.subr.bf16.mxu0 0
    %529 = vmatpush1.bf16.msra.mxu0 0
    %530 = vmatprep.subr.bf16.mxu0 0
    %531 = vmatpush1.bf16.msra.mxu0 0
    %532 = vmatprep.subr.bf16.mxu0 0
    %533 = vmatpush1.bf16.msra.mxu0 0
    %534 = vmatprep.subr.bf16.mxu0 0
    %535 = vmatpush1.bf16.msra.mxu0 0
    %536 = vmatprep.subr.bf16.mxu0 0
    %537 = vmatpush1.bf16.msra.mxu0 0
    %538 = vmatprep.subr.bf16.mxu0 0
    %539 = vmatpush1.bf16.msra.mxu0 0
    %540 = vmatprep.subr.bf16.mxu0 0
    %541 = vmatpush1.bf16.msra.mxu0 0
    %542 = vmatprep.subr.bf16.mxu0 0
    %543 = vmatpush1.bf16.msra.mxu0 0
    %544 = vmatprep.subr.bf16.mxu0 0
    %545 = vmatpush1.bf16.msra.mxu0 0
    %546 = vmatprep.subr.bf16.mxu0 0
    %547 = vmatpush1.bf16.msra.mxu0 0
    %548 = vmatprep.subr.bf16.mxu0 0
    %549 = vmatpush1.bf16.msra.mxu0 0
    %550 = vmatprep.mubr.bf16.mxu0 0
    %551 = vmatmul.mubr.bf16.gmra.mrb[0].mxu0 %v336
    %v552 = vpop.f32.mrb[0].mxu0
    %v553 = vadd.f32 0.0, %v552
    %v554 = vpop.f32.mrb[0].mxu0
    %v555 = vpop.f32.mrb[0].mxu0
    %v556 = vadd.f32 0.0, %v555
    %v557 = vpop.f32.mrb[0].mxu0
    %558 = vmatprep.mubr.bf16.mxu0 0
    %559 = vmatmul.mubr.bf16.gmra.mrb[0].mxu0 %v339
    %v560 = vpop.f32.mrb[0].mxu0
    %v561 = vadd.f32 0.0, %v560
    %v562 = vpop.f32.mrb[0].mxu0
    %v563 = vpop.f32.mrb[0].mxu0
    %v564 = vpop.f32.mrb[0].mxu0
    %565 = vdwg.mxu0
    %v566 = vpack.c.bf16 %v556, %v553
    %v567 = vpack.c.bf16 %v561, %v561
    %568 = vmatprep.subr.bf16.mxu0 0
    %569 = vmatpush1.bf16.msra.mxu0 %v443
    %570 = vmatprep.subr.bf16.mxu0 0
    %571 = vmatpush1.bf16.msra.mxu0 %v444
    %572 = vmatprep.subr.bf16.mxu0 0
    %573 = vmatpush1.bf16.msra.mxu0 %v445
    %574 = vmatprep.subr.bf16.mxu0 0
    %575 = vmatpush1.bf16.msra.mxu0 %v446
    %576 = vmatprep.subr.bf16.mxu0 0
    %577 = vmatpush1.bf16.msra.mxu0 %v447
    %578 = vmatprep.subr.bf16.mxu0 0
    %579 = vmatpush1.bf16.msra.mxu0 %v448
    %580 = vmatprep.subr.bf16.mxu0 0
    %581 = vmatpush1.bf16.msra.mxu0 %v449
    %582 = vmatprep.subr.bf16.mxu0 0
    %583 = vmatpush1.bf16.msra.mxu0 %v450
    %584 = vmatprep.subr.bf16.mxu0 0
    %585 = vmatpush1.bf16.msra.mxu0 0
    %586 = vmatprep.subr.bf16.mxu0 0
    %587 = vmatpush1.bf16.msra.mxu0 0
    %588 = vmatprep.subr.bf16.mxu0 0
    %589 = vmatpush1.bf16.msra.mxu0 0
    %590 = vmatprep.subr.bf16.mxu0 0
    %591 = vmatpush1.bf16.msra.mxu0 0
    %592 = vmatprep.subr.bf16.mxu0 0
    %593 = vmatpush1.bf16.msra.mxu0 0
    %594 = vmatprep.subr.bf16.mxu0 0
    %595 = vmatpush1.bf16.msra.mxu0 0
    %596 = vmatprep.subr.bf16.mxu0 0
    %597 = vmatpush1.bf16.msra.mxu0 0
    %598 = vmatprep.subr.bf16.mxu0 0
    %599 = vmatpush1.bf16.msra.mxu0 0
    %600 = vmatprep.mubr.bf16.mxu0 0
    %601 = vmatmul.mubr.bf16.gmra.mrb[0].mxu0 %v566
    %v602 = vpop.f32.mrb[0].mxu0
    %v603 = vadd.f32 0.0, %v602
    %v604 = vpop.f32.mrb[0].mxu0
    %v605 = vpop.f32.mrb[0].mxu0
    %v606 = vadd.f32 0.0, %v605
    %v607 = vpop.f32.mrb[0].mxu0
    %608 = vmatprep.mubr.bf16.mxu0 0
    %609 = vmatmul.mubr.bf16.gmra.mrb[0].mxu0 %v567
    %v610 = vpop.f32.mrb[0].mxu0
    %v611 = vadd.f32 0.0, %v610
    %v612 = vpop.f32.mrb[0].mxu0
    %v613 = vpop.f32.mrb[0].mxu0
    %v614 = vpop.f32.mrb[0].mxu0
    %615 = vdwg.mxu0
    %v616 = vadd.f32 %v305, %v603
    %v617 = vadd.f32 %v308, %v606
    %v618 = vadd.f32 %v313, %v611
    %v619 = vmax.f32 %v616, 0.0
    %v620 = vmax.f32 %v617, 0.0
    %v621 = vmax.f32 %v618, 0.0
    %v622 = vld [vmem:[%s3] sm:$0xf]
    %v623 = vld [vmem:[%s3 + $0x4] sm:$0xf]
    %v624 = vpack.c.bf16 %v620, %v619
    %v625 = vpack.c.bf16 %v621, %v621
    %v628 = vunpack.c.l.b16 %v622
    %v629 = vunpack.c.l.b16 %v623
    %v630 = vpack.c.b16 %v629, %v628
    %v632 = vsel %vm334, %v630, 0
    %v635 = vsel %vm341, %v625, 0
    %637 = vmatprep.subr.bf16.mxu0 0
    %638 = vmatpush1.bf16.msra.mxu0 %v624
    %639 = vmatprep.subr.bf16.mxu0 0
    %640 = vmatpush1.bf16.msra.mxu0 %v635
    %641 = vmatprep.subr.bf16.mxu0 0
    %642 = vmatpush1.bf16.msra.mxu0 0
    %643 = vmatprep.subr.bf16.mxu0 0
    %644 = vmatpush1.bf16.msra.mxu0 0
    %645 = vmatprep.subr.bf16.mxu0 0
    %646 = vmatpush1.bf16.msra.mxu0 0
    %647 = vmatprep.subr.bf16.mxu0 0
    %648 = vmatpush1.bf16.msra.mxu0 0
    %649 = vmatprep.subr.bf16.mxu0 0
    %650 = vmatpush1.bf16.msra.mxu0 0
    %651 = vmatprep.subr.bf16.mxu0 0
    %652 = vmatpush1.bf16.msra.mxu0 0
    %653 = vmatprep.subr.bf16.mxu0 0
    %654 = vmatpush1.bf16.msra.mxu0 0
    %655 = vmatprep.subr.bf16.mxu0 0
    %656 = vmatpush1.bf16.msra.mxu0 0
    %657 = vmatprep.subr.bf16.mxu0 0
    %658 = vmatpush1.bf16.msra.mxu0 0
    %659 = vmatprep.subr.bf16.mxu0 0
    %660 = vmatpush1.bf16.msra.mxu0 0
    %661 = vmatprep.subr.bf16.mxu0 0
    %662 = vmatpush1.bf16.msra.mxu0 0
    %663 = vmatprep.subr.bf16.mxu0 0
    %664 = vmatpush1.bf16.msra.mxu0 0
    %665 = vmatprep.subr.bf16.mxu0 0
    %666 = vmatpush1.bf16.msra.mxu0 0
    %667 = vmatprep.subr.bf16.mxu0 0
    %668 = vmatpush1.bf16.msra.mxu0 0
    %669 = vmatprep.mubr.bf16.mxu0 0
    %670 = vmatmul.mubr.bf16.gmra.mrb[0].mxu0 %v632
    %v671 = vpop.f32.mrb[0].mxu0
    %v672 = vadd.f32 0.0, %v671
    %v673 = vpop.f32.mrb[0].mxu0
    %v674 = vpop.f32.mrb[0].mxu0
    %v675 = vadd.f32 0.0, %v674
    %v676 = vpop.f32.mrb[0].mxu0
    %677 = vdwg.mxu0
    %v678 = vld [vmem:[#allocation5] sm:$0xff]
    %v679 = vld [vmem:[#allocation5 + $0x8] sm:$0xff]
    %v680 = vld [vmem:[#allocation10] sm:$0xf]
    %v681 = vld [vmem:[#allocation10 + $0x4] sm:$0xf]
    %v682 = vld [vmem:[#allocation10 + $0x8] sm:$0xf]
    %v683 = vld [vmem:[#allocation10 + $0xc] sm:$0xf]
    %v684 = vld [vmem:[#allocation10 + $0x10] sm:$0xf]
    %v685 = vld [vmem:[#allocation10 + $0x14] sm:$0xf]
    %v686 = vld [vmem:[#allocation10 + $0x18] sm:$0xf]
    %v687 = vld [vmem:[#allocation10 + $0x1c] sm:$0xf]
    %v688 = vld [vmem:[#allocation10 + $0x20] sm:$0xf]
    %v689 = vld [vmem:[#allocation10 + $0x24] sm:$0xf]
    %v690 = vld [vmem:[#allocation10 + $0x28] sm:$0xf]
    %v691 = vld [vmem:[#allocation10 + $0x2c] sm:$0xf]
    %v692 = vld [vmem:[#allocation10 + $0x30] sm:$0xf]
    %v693 = vld [vmem:[#allocation10 + $0x34] sm:$0xf]
    %v694 = vld [vmem:[#allocation10 + $0x38] sm:$0xf]
    %v695 = vld [vmem:[#allocation10 + $0x3c] sm:$0xf]
    %v696 = vld [vmem:[#allocation10 + $0x40] sm:$0xf]
    %v697 = vld [vmem:[#allocation10 + $0x44] sm:$0xf]
    %v698 = vld [vmem:[#allocation10 + $0x48] sm:$0xf]
    %v699 = vld [vmem:[#allocation10 + $0x4c] sm:$0xf]
    %v700 = vld [vmem:[#allocation10 + $0x50] sm:$0xf]
    %v701 = vld [vmem:[#allocation10 + $0x54] sm:$0xf]
    %v702 = vld [vmem:[#allocation10 + $0x58] sm:$0xf]
    %v703 = vld [vmem:[#allocation10 + $0x5c] sm:$0xf]
    %v704 = vld [vmem:[#allocation10 + $0x60] sm:$0xf]
    %v705 = vld [vmem:[#allocation10 + $0x64] sm:$0xf]
    %v706 = vld [vmem:[#allocation10 + $0x68] sm:$0xf]
    %v707 = vld [vmem:[#allocation10 + $0x6c] sm:$0xf]
    %v708 = vld [vmem:[#allocation10 + $0x70] sm:$0xf]
    %v709 = vld [vmem:[#allocation10 + $0x74] sm:$0xf]
    %v710 = vld [vmem:[#allocation10 + $0x78] sm:$0xf]
    %v711 = vld [vmem:[#allocation10 + $0x7c] sm:$0xf]
    %v712 = vpack.c.bf16 %v675, %v672
    %v713 = vld [vmem:[#allocation11] sm:$0xf]
    %v714 = vld [vmem:[#allocation11 + $0x4] sm:$0xf]
    %v715 = vld [vmem:[#allocation11 + $0x8] sm:$0xf]
    %v716 = vld [vmem:[#allocation11 + $0xc] sm:$0xf]
    %v717 = vld [vmem:[#allocation11 + $0x10] sm:$0xf]
    %v718 = vld [vmem:[#allocation11 + $0x14] sm:$0xf]
    %v719 = vld [vmem:[#allocation11 + $0x18] sm:$0xf]
    %v720 = vld [vmem:[#allocation11 + $0x1c] sm:$0xf]
    %v721 = vld [vmem:[#allocation11 + $0x20] sm:$0xf]
    %v722 = vld [vmem:[#allocation11 + $0x24] sm:$0xf]
    %v723 = vld [vmem:[#allocation11 + $0x28] sm:$0xf]
    %v724 = vld [vmem:[#allocation11 + $0x2c] sm:$0xf]
    %v725 = vld [vmem:[#allocation11 + $0x30] sm:$0xf]
    %v726 = vld [vmem:[#allocation11 + $0x34] sm:$0xf]
    %v727 = vld [vmem:[#allocation11 + $0x38] sm:$0xf]
    %v728 = vld [vmem:[#allocation11 + $0x3c] sm:$0xf]
    %v745 = vunpack.c.l.b16 %v713
    %v746 = vunpack.c.l.b16 %v714
    %v747 = vunpack.c.l.b16 %v715
    %v748 = vunpack.c.l.b16 %v716
    %v749 = vunpack.c.l.b16 %v717
    %v750 = vunpack.c.l.b16 %v718
    %v751 = vunpack.c.l.b16 %v719
    %v752 = vunpack.c.l.b16 %v720
    %v753 = vunpack.c.l.b16 %v721
    %v754 = vunpack.c.l.b16 %v722
    %v755 = vunpack.c.l.b16 %v723
    %v756 = vunpack.c.l.b16 %v724
    %v757 = vunpack.c.l.b16 %v725
    %v758 = vunpack.c.l.b16 %v726
    %v759 = vunpack.c.l.b16 %v727
    %v760 = vunpack.c.l.b16 %v728
    %v761 = vpack.c.b16 %v746, %v745
    %v762 = vpack.c.b16 %v748, %v747
    %v763 = vpack.c.b16 %v750, %v749
    %v764 = vpack.c.b16 %v752, %v751
    %v765 = vpack.c.b16 %v754, %v753
    %v766 = vpack.c.b16 %v756, %v755
    %v767 = vpack.c.b16 %v758, %v757
    %v768 = vpack.c.b16 %v760, %v759
    %777 = vmatprep.subr.bf16.mxu0 0
    %778 = vmatpush1.bf16.msra.mxu0 %v761
    %779 = vmatprep.subr.bf16.mxu0 0
    %780 = vmatpush1.bf16.msra.mxu0 %v762
    %781 = vmatprep.subr.bf16.mxu0 0
    %782 = vmatpush1.bf16.msra.mxu0 %v763
    %783 = vmatprep.subr.bf16.mxu0 0
    %784 = vmatpush1.bf16.msra.mxu0 %v764
    %785 = vmatprep.subr.bf16.mxu0 0
    %786 = vmatpush1.bf16.msra.mxu0 %v765
    %787 = vmatprep.subr.bf16.mxu0 0
    %788 = vmatpush1.bf16.msra.mxu0 %v766
    %789 = vmatprep.subr.bf16.mxu0 0
    %790 = vmatpush1.bf16.msra.mxu0 %v767
    %791 = vmatprep.subr.bf16.mxu0 0
    %792 = vmatpush1.bf16.msra.mxu0 %v768
    %793 = vmatprep.subr.bf16.mxu0 0
    %794 = vmatpush1.bf16.msra.mxu0 0
    %795 = vmatprep.subr.bf16.mxu0 0
    %796 = vmatpush1.bf16.msra.mxu0 0
    %797 = vmatprep.subr.bf16.mxu0 0
    %798 = vmatpush1.bf16.msra.mxu0 0
    %799 = vmatprep.subr.bf16.mxu0 0
    %800 = vmatpush1.bf16.msra.mxu0 0
    %801 = vmatprep.subr.bf16.mxu0 0
    %802 = vmatpush1.bf16.msra.mxu0 0
    %803 = vmatprep.subr.bf16.mxu0 0
    %804 = vmatpush1.bf16.msra.mxu0 0
    %805 = vmatprep.subr.bf16.mxu0 0
    %806 = vmatpush1.bf16.msra.mxu0 0
    %807 = vmatprep.subr.bf16.mxu0 0
    %808 = vmatpush1.bf16.msra.mxu0 0
    %809 = vmatprep.mubr.bf16.mxu0 0
    %810 = vmatmul.mubr.bf16.gmra.mrb[0].mxu0 %v712
    %v811 = vpop.f32.mrb[0].mxu0
    %v812 = vadd.f32 0.0, %v811
    %v813 = vpop.f32.mrb[0].mxu0
    %v814 = vpop.f32.mrb[0].mxu0
    %v815 = vadd.f32 0.0, %v814
    %v816 = vpop.f32.mrb[0].mxu0
    %817 = vdwg.mxu0
    %v820 = vunpack.c.l.b16 %v678
    %v821 = vunpack.c.h.b16 %v678
    %v822 = vunpack.c.l.b16 %v679
    %v823 = vunpack.c.h.b16 %v679
    %v824 = vpack.c.b16 %v822, %v820
    %v825 = vpack.c.b16 %v823, %v821
    %v860 = vunpack.c.l.b16 %v680
    %v861 = vunpack.c.l.b16 %v681
    %v862 = vunpack.c.l.b16 %v682
    %v863 = vunpack.c.l.b16 %v683
    %v864 = vunpack.c.l.b16 %v684
    %v865 = vunpack.c.l.b16 %v685
    %v866 = vunpack.c.l.b16 %v686
    %v867 = vunpack.c.l.b16 %v687
    %v868 = vunpack.c.l.b16 %v688
    %v869 = vunpack.c.l.b16 %v689
    %v870 = vunpack.c.l.b16 %v690
    %v871 = vunpack.c.l.b16 %v691
    %v872 = vunpack.c.l.b16 %v692
    %v873 = vunpack.c.l.b16 %v693
    %v874 = vunpack.c.l.b16 %v694
    %v875 = vunpack.c.l.b16 %v695
    %v876 = vunpack.c.l.b16 %v696
    %v877 = vunpack.c.l.b16 %v697
    %v878 = vunpack.c.l.b16 %v698
    %v879 = vunpack.c.l.b16 %v699
    %v880 = vunpack.c.l.b16 %v700
    %v881 = vunpack.c.l.b16 %v701
    %v882 = vunpack.c.l.b16 %v702
    %v883 = vunpack.c.l.b16 %v703
    %v884 = vunpack.c.l.b16 %v704
    %v885 = vunpack.c.l.b16 %v705
    %v886 = vunpack.c.l.b16 %v706
    %v887 = vunpack.c.l.b16 %v707
    %v888 = vunpack.c.l.b16 %v708
    %v889 = vunpack.c.l.b16 %v709
    %v890 = vunpack.c.l.b16 %v710
    %v891 = vunpack.c.l.b16 %v711
    %v892 = vpack.c.b16 %v861, %v860
    %v893 = vpack.c.b16 %v863, %v862
    %v894 = vpack.c.b16 %v865, %v864
    %v895 = vpack.c.b16 %v867, %v866
    %v896 = vpack.c.b16 %v869, %v868
    %v897 = vpack.c.b16 %v871, %v870
    %v898 = vpack.c.b16 %v873, %v872
    %v899 = vpack.c.b16 %v875, %v874
    %v900 = vpack.c.b16 %v877, %v876
    %v901 = vpack.c.b16 %v879, %v878
    %v902 = vpack.c.b16 %v881, %v880
    %v903 = vpack.c.b16 %v883, %v882
    %v904 = vpack.c.b16 %v885, %v884
    %v905 = vpack.c.b16 %v887, %v886
    %v906 = vpack.c.b16 %v889, %v888
    %v907 = vpack.c.b16 %v891, %v890
    %924 = vmatprep.subr.bf16.mxu0 0
    %925 = vmatpush1.bf16.msra.mxu0 %v892
    %926 = vmatprep.subr.bf16.mxu0 0
    %927 = vmatpush1.bf16.msra.mxu0 %v893
    %928 = vmatprep.subr.bf16.mxu0 0
    %929 = vmatpush1.bf16.msra.mxu0 %v894
    %930 = vmatprep.subr.bf16.mxu0 0
    %931 = vmatpush1.bf16.msra.mxu0 %v895
    %932 = vmatprep.subr.bf16.mxu0 0
    %933 = vmatpush1.bf16.msra.mxu0 %v896
    %934 = vmatprep.subr.bf16.mxu0 0
    %935 = vmatpush1.bf16.msra.mxu0 %v897
    %936 = vmatprep.subr.bf16.mxu0 0
    %937 = vmatpush1.bf16.msra.mxu0 %v898
    %938 = vmatprep.subr.bf16.mxu0 0
    %939 = vmatpush1.bf16.msra.mxu0 %v899
    %940 = vmatprep.subr.bf16.mxu0 0
    %941 = vmatpush1.bf16.msra.mxu0 %v900
    %942 = vmatprep.subr.bf16.mxu0 0
    %943 = vmatpush1.bf16.msra.mxu0 %v901
    %944 = vmatprep.subr.bf16.mxu0 0
    %945 = vmatpush1.bf16.msra.mxu0 %v902
    %946 = vmatprep.subr.bf16.mxu0 0
    %947 = vmatpush1.bf16.msra.mxu0 %v903
    %948 = vmatprep.subr.bf16.mxu0 0
    %949 = vmatpush1.bf16.msra.mxu0 %v904
    %950 = vmatprep.subr.bf16.mxu0 0
    %951 = vmatpush1.bf16.msra.mxu0 %v905
    %952 = vmatprep.subr.bf16.mxu0 0
    %953 = vmatpush1.bf16.msra.mxu0 %v906
    %954 = vmatprep.subr.bf16.mxu0 0
    %955 = vmatpush1.bf16.msra.mxu0 %v907
    %956 = vmatprep.mubr.bf16.mxu0 %v825
    %957 = vmatmul.mubr.bf16.gmra.mrb[0].mxu0 %v824
    %v958 = vpop.f32.mrb[0].mxu0
    %v959 = vadd.f32 %v812, %v958
    %v960 = vpop.f32.mrb[0].mxu0
    %v961 = vpop.f32.mrb[0].mxu0
    %v962 = vadd.f32 %v815, %v961
    %v963 = vpop.f32.mrb[0].mxu0
    %964 = vdwg.mxu0
    %v965 = vld [vmem:[%s10] sm:$0x1]
    %v967 = vlaneseq
    %v968 = vshrl.u32 %v967, 7
    %v969 = vsub.s32 0, %v968
    %v970 = vrot.slane %v965, %v969
    %v972 = vadd.f32 %v959, %v970
    %v973 = vadd.f32 %v962, %v970
    %v974 = vmax.f32 %v972, 0.0
    %v975 = vmax.f32 %v973, 0.0
    %v976 = vld [vmem:[%s4] sm:$0xf]
    %v977 = vpack.c.bf16 %v975, %v974
    %vm978 = vcmask 130048
    %v980 = vsel %vm978, %v976, 0
    %982 = vmatprep.subr.bf16.mxu0 0
    %983 = vmatpush1.bf16.msra.mxu0 %v977
    %984 = vmatprep.subr.bf16.mxu0 0
    %985 = vmatpush1.bf16.msra.mxu0 0
    %986 = vmatprep.subr.bf16.mxu0 0
    %987 = vmatpush1.bf16.msra.mxu0 0
    %988 = vmatprep.subr.bf16.mxu0 0
    %989 = vmatpush1.bf16.msra.mxu0 0
    %990 = vmatprep.subr.bf16.mxu0 0
    %991 = vmatpush1.bf16.msra.mxu0 0
    %992 = vmatprep.subr.bf16.mxu0 0
    %993 = vmatpush1.bf16.msra.mxu0 0
    %994 = vmatprep.subr.bf16.mxu0 0
    %995 = vmatpush1.bf16.msra.mxu0 0
    %996 = vmatprep.subr.bf16.mxu0 0
    %997 = vmatpush1.bf16.msra.mxu0 0
    %998 = vmatprep.subr.bf16.mxu0 0
    %999 = vmatpush1.bf16.msra.mxu0 0
    %1000 = vmatprep.subr.bf16.mxu0 0
    %1001 = vmatpush1.bf16.msra.mxu0 0
    %1002 = vmatprep.subr.bf16.mxu0 0
    %1003 = vmatpush1.bf16.msra.mxu0 0
    %1004 = vmatprep.subr.bf16.mxu0 0
    %1005 = vmatpush1.bf16.msra.mxu0 0
    %1006 = vmatprep.subr.bf16.mxu0 0
    %1007 = vmatpush1.bf16.msra.mxu0 0
    %1008 = vmatprep.subr.bf16.mxu0 0
    %1009 = vmatpush1.bf16.msra.mxu0 0
    %1010 = vmatprep.subr.bf16.mxu0 0
    %1011 = vmatpush1.bf16.msra.mxu0 0
    %1012 = vmatprep.subr.bf16.mxu0 0
    %1013 = vmatpush1.bf16.msra.mxu0 0
    %1014 = vmatprep.mubr.bf16.mxu0 0
    %1015 = vmatmul.mubr.bf16.gmra.mrb[0].mxu0 %v980
    %v1016 = vpop.f32.mrb[0].mxu0
    %v1017 = vadd.f32 0.0, %v1016
    %v1018 = vpop.f32.mrb[0].mxu0
    %v1019 = vpop.f32.mrb[0].mxu0
    %v1020 = vpop.f32.mrb[0].mxu0
    %1021 = vdwg.mxu0
    %v1022 = vld [vmem:[%s5] sm:$0xff]
    %1024 = vset.pattern.permute.xlu0 0
    %1025 = vperm.xlu0 %1024, %v1022
    %v1026 = vpop.permute.xlu0 %1025
    %v1028 = vmul.f32 %v1017, %v1026
    %1029 = vst [vmem:[#allocation13] sm:$0xff] %v1028
    // Predicated region
    $region70: #{tpu_custom_call.1} parent=1 // pred_check
      _
    $region71: #{tpu_custom_call.1} parent=1 // pred_check_branch
      %1031 = sbr.rel (0) target = $region73
    $region72: #{tpu_custom_call.1} parent=1 // pred_region
      %s1033 = ssub.s32 128, 128
      %1034 = vsyncadd [#allocation4], %s1033
      %s1036 = sshll.u32 [#allocation13], 4
      %s1037 = int_to_ptr.vmem [resolvable:$true] %s1036
      %1039 = dma.vmem_to_hbm [thread:$0]  %s1037, 128, %s11, [#allocation4]
    $region73: #{tpu_custom_call.1} parent=1 // pred_fallthru
      _
    // Predicated region
    $region74: #{tpu_custom_call.1} parent=1 // pred_check
      _
    $region75: #{tpu_custom_call.1} parent=1 // pred_check_branch
      %1041 = sbr.rel (0) target = $region77
    $region76: #{tpu_custom_call.1} parent=1 // pred_region
      %1042 = dma.done [#allocation4], 128
    $region77: #{tpu_custom_call.1} parent=1 // pred_fallthru
      _
    %1043 = vsyncpa [#allocation3], 1
    %1044 = vsyncpa [#allocation6], 1
    %1045 = vsyncpa [#allocation9], 1
    %1046 = vsyncpa [#allocation12], 1
    %1047 = vsyncpa [#allocation4], 1

</llo_original>
